<compile_context>
chip_gen: v7x
topology: tpu7x:2x2x1
jax: 0.10.0
libtpu: 0.0.40
codegen_flags: <defaults>
</compile_context>

<pallas_src>
import math

import jax
import jax.numpy as jnp
from jax import lax
from jax.experimental import pallas as pl
from jax.experimental.pallas import tpu as pltpu

LN_EPS = 1e-5  # torch.nn.LayerNorm default

# Per-step VMEM budget for the tiles of one grid step (honest accounting:
# double-buffered in + out tiles at the input dtype PLUS the in-kernel f32
# working copies).  Well under the v7x 32 MiB scoped default / 64 MiB VMEM.
_TILE_VMEM_BUDGET_BYTES = 16 * 1024 * 1024
_TARGET_TILE_ROWS = 1024
_MIN_GRID_STEPS = 8          # keep both v7x TensorCores fed
_MIN_PALLAS_ELEMENTS = 32 * 1024  # below this, XLA LN beats kernel dispatch


def _round_up8(n: int) -> int:
    return max(8, ((n + 7) // 8) * 8)


def _choose_tile_rows(rows: int, d: int, itemsize: int) -> int:
    """Row-tile size: big (toward 1024) but within VMEM budget, >=8 grid steps."""
    # Per row of tile:
    #   2x input buffer  (double-buffered, input dtype)
    #   2x output buffer (double-buffered, input dtype)
    #   ~2 live full-tile f32 intermediates inside the kernel body
    bytes_per_row = d * (4 * itemsize + 8)
    max_rows_by_vmem = max(8, _TILE_VMEM_BUDGET_BYTES // bytes_per_row)
    tile = min(_TARGET_TILE_ROWS, max_rows_by_vmem)
    if rows >= 16:
        # Guarantee several grid steps so the "parallel" axis shards across
        # the two v7x TensorCores (no effect on v5e/v6e single-TC chips).
        tile = min(tile, pl.cdiv(rows, _MIN_GRID_STEPS))
    tile = max(8, (tile // 8) * 8)           # sublane multiple
    return min(tile, _round_up8(rows))       # never (much) bigger than rows


def _layernorm_kernel(x_ref, g_ref, b_ref, o_ref):
    # x_ref: (TILE_R, D) block; g_ref/b_ref: (1, D); o_ref: (TILE_R, D)
    x = x_ref[...].astype(jnp.float32)
    d = x.shape[-1]
    inv_d = 1.0 / d

    # One-pass statistics: the two cross-lane reductions are independent
    # (overlap on the XLU) instead of being serialized through `x - mean`.
    mean = jnp.sum(x, axis=-1, keepdims=True) * inv_d          # (TILE_R, 1)
    mean_sq = jnp.sum(x * x, axis=-1, keepdims=True) * inv_d   # (TILE_R, 1)
    var = jnp.maximum(mean_sq - mean * mean, 0.0)              # clamp cancellation
    inv = lax.rsqrt(var + LN_EPS)                              # (TILE_R, 1)

    if x_ref.dtype == jnp.bfloat16:
        # v6e/v7x: bf16-native VPU -> do the elementwise phase in bf16; the
        # statistics above stay in f32.
        cdt = jnp.bfloat16
        xv = x_ref[...]
    else:
        cdt = jnp.float32
        xv = x

    xc = xv - mean.astype(cdt)                                 # (TILE_R, D)
    y = xc * inv.astype(cdt)
    out = y * g_ref[...].astype(cdt) + b_ref[...].astype(cdt)  # row/lane bcast
    o_ref[...] = out.astype(o_ref.dtype)


def _layernorm_xla(x, gamma, beta):
    """Plain-XLA LayerNorm: reference and fallback for tiny / narrow-D inputs."""
    x32 = x.astype(jnp.float32)
    mean = jnp.mean(x32, axis=-1, keepdims=True)
    var = jnp.mean(jnp.square(x32 - mean), axis=-1, keepdims=True)
    y = (x32 - mean) * lax.rsqrt(var + LN_EPS)
    return (y * gamma + beta).astype(x.dtype)


def layernorm_pallas(x, gamma, beta):
    """LayerNorm over the last axis of x (any leading dims)."""
    orig_shape = x.shape
    D = orig_shape[-1]
    rows = math.prod(orig_shape[:-1]) if len(orig_shape) > 1 else 1

    # Route shapes the kernel cannot handle efficiently to plain XLA:
    #  * D not lane-dense (not a multiple of 128) -> masked partial stores
    #  * tiny tensors / too few rows -> per-call + per-step overhead dominates
    if D % 128 != 0 or rows < 8 or rows * D < _MIN_PALLAS_ELEMENTS:
        return _layernorm_xla(x, gamma, beta)

    x2 = x.reshape(rows, D)
    tile_r = _choose_tile_rows(rows, D, x.dtype.itemsize)
    grid = (pl.cdiv(rows, tile_r),)  # ragged last block: OOB writes are masked

    out = pl.pallas_call(
        _layernorm_kernel,
        out_shape=jax.ShapeDtypeStruct((rows, D), x.dtype),
        grid_spec=pltpu.PrefetchScalarGridSpec(
            num_scalar_prefetch=0,
            grid=grid,
            in_specs=[
                pl.BlockSpec((tile_r, D), lambda i: (i, 0)),
                pl.BlockSpec((1, D), lambda i: (0, 0)),   # gamma: VMEM-resident
                pl.BlockSpec((1, D), lambda i: (0, 0)),   # beta:  VMEM-resident
            ],
            out_specs=pl.BlockSpec((tile_r, D), lambda i: (i, 0)),
        ),
        compiler_params=pltpu.CompilerParams(
            dimension_semantics=("parallel",),     # shard row tiles across TCs
            vmem_limit_bytes=32 * 1024 * 1024,     # footprint stays well below
        ),
    )(x2, gamma.reshape(1, D), beta.reshape(1, D))

    return out.reshape(orig_shape)


class PreNormPallas:
    """JAX/Pallas mirror of clara/perceiver.py::PreNorm."""

    def __init__(self, dim, fn, context_dim=None, *, key=None):
        self.fn = fn
        key = jax.random.PRNGKey(0) if key is None else key
        k1, k2, k3, k4 = jax.random.split(key, 4)
        # nn.LayerNorm params (elementwise_affine=True).  Torch inits to
        # ones/zeros; we perturb deterministically so the affine path is
        # actually exercised.
        self.g = 1.0 + 0.01 * jax.random.normal(k1, (dim,), jnp.float32)
        self.b = 0.01 * jax.random.normal(k2, (dim,), jnp.float32)
        if context_dim is not None:
            self.gc = 1.0 + 0.01 * jax.random.normal(k3, (context_dim,), jnp.float32)
            self.bc = 0.01 * jax.random.normal(k4, (context_dim,), jnp.float32)
        else:
            self.gc = None
            self.bc = None
        # Single jitted program: both pallas_calls + fn compile together, so
        # the two LayerNorm DMAs can overlap and dispatch is amortized.
        self._forward = jax.jit(self._forward_impl)

    def _forward_impl(self, x, kwargs):
        x = layernorm_pallas(x, self.g, self.b)
        if self.gc is not None:
            context = kwargs["context"]
            normed_context = layernorm_pallas(context, self.gc, self.bc)
            kwargs = dict(kwargs, context=normed_context)
        return self.fn(x, **kwargs)

    def __call__(self, x, **kwargs):
        return self._forward(x, kwargs)


if __name__ == "__main__":
    # Lane-dense feature dims (multiples of 128) so the Pallas path is taken
    # for both x and context; shapes stay small (a few hundred KiB).
    B, N, D = 2, 256, 128        # x:       (batch, seq, dim)
    M, DC = 128, 256             # context: (batch, ctx_seq, context_dim)

    key = jax.random.PRNGKey(0)
    kx, kc, kw1, kw2, kparams = jax.random.split(key, 5)

    x = jax.random.normal(kx, (B, N, D), jnp.float32)
    context = jax.random.normal(kc, (B, M, DC), jnp.float32)

    # The wrapped `fn`: a small deterministic mixer consuming x and context.
    W_x = jax.random.normal(kw1, (D, D), jnp.float32) * 0.05
    W_c = jax.random.normal(kw2, (DC, D), jnp.float32) * 0.05

    def fn(x, context=None):
        out = jnp.einsum("bnd,de->bne", x, W_x)
        if context is not None:
            out = out + jnp.mean(
                jnp.einsum("bmc,ce->bme", context, W_c), axis=1, keepdims=True
            )
        return out

    prenorm = PreNormPallas(D, fn, context_dim=DC, key=kparams)

    out = prenorm(x, context=context)
    out = jax.block_until_ready(out)

    # Pure-JAX reference for the full PreNorm forward.
    ref = fn(
        _layernorm_xla(x, prenorm.g, prenorm.b),
        context=_layernorm_xla(context, prenorm.gc, prenorm.bc),
    )

    assert out.shape == (B, N, D), out.shape
    max_err = float(jnp.max(jnp.abs(out - ref)))
    assert jnp.allclose(out, ref, atol=2e-5, rtol=2e-5), max_err
    print("KERNEL_OK")
</pallas_src>

<mosaic_0001>
module attributes {stable_mosaic.version = 11 : i64} {
  func.func @_layernorm_kernel(%arg0: i32, %arg1: memref<32x256xf32, #tpu.memory_space<vmem>>, %arg2: memref<1x256xf32, #tpu.memory_space<vmem>>, %arg3: memref<1x256xf32, #tpu.memory_space<vmem>>, %arg4: memref<32x256xf32, #tpu.memory_space<vmem>>) attributes {dimension_semantics = [#tpu.dimension_semantics<parallel>], iteration_bounds = array<i64: 8>, scalar_prefetch = 0 : i64, scratch_operands = 0 : i64, tpu.core_type = #tpu.core_type<tc>, window_params = [{transform_indices = @transform_0, window_bounds = array<i64: 32, 256>}, {pipeline_mode = #tpu.pipeline_mode<synchronous>, transform_indices = @transform_1, window_bounds = array<i64: 1, 256>}, {pipeline_mode = #tpu.pipeline_mode<synchronous>, transform_indices = @transform_2, window_bounds = array<i64: 1, 256>}, {transform_indices = @transform_3, window_bounds = array<i64: 32, 256>}]} {
    %c0 = arith.constant 0 : index
    %c0_0 = arith.constant 0 : index
    %0 = vector.load %arg1[%c0, %c0_0] : memref<32x256xf32, #tpu.memory_space<vmem>>, vector<32x256xf32>
    %cst = arith.constant dense<0.000000e+00> : vector<32xf32>
    %1 = vector.multi_reduction <add>, %0, %cst [1] : vector<32x256xf32> to vector<32xf32>
    %2 = vector.shape_cast %1 : vector<32xf32> to vector<32x1xf32>
    %cst_1 = arith.constant 3.906250e-03 : f32
    %3 = vector.broadcast %cst_1 : f32 to vector<32x1xf32>
    %4 = arith.mulf %2, %3 : vector<32x1xf32>
    %5 = arith.mulf %0, %0 : vector<32x256xf32>
    %cst_2 = arith.constant dense<0.000000e+00> : vector<32xf32>
    %6 = vector.multi_reduction <add>, %5, %cst_2 [1] : vector<32x256xf32> to vector<32xf32>
    %7 = vector.shape_cast %6 : vector<32xf32> to vector<32x1xf32>
    %cst_3 = arith.constant 3.906250e-03 : f32
    %8 = vector.broadcast %cst_3 : f32 to vector<32x1xf32>
    %9 = arith.mulf %7, %8 : vector<32x1xf32>
    %10 = arith.mulf %4, %4 : vector<32x1xf32>
    %11 = arith.subf %9, %10 : vector<32x1xf32>
    %cst_4 = arith.constant 0.000000e+00 : f32
    %12 = vector.broadcast %cst_4 : f32 to vector<32x1xf32>
    %13 = arith.maximumf %11, %12 : vector<32x1xf32>
    %cst_5 = arith.constant 9.99999974E-6 : f32
    %14 = vector.broadcast %cst_5 : f32 to vector<32x1xf32>
    %15 = arith.addf %13, %14 : vector<32x1xf32>
    %16 = math.rsqrt %15 : vector<32x1xf32>
    %17 = vector.broadcast %4 : vector<32x1xf32> to vector<32x256xf32>
    %18 = arith.subf %0, %17 : vector<32x256xf32>
    %19 = vector.broadcast %16 : vector<32x1xf32> to vector<32x256xf32>
    %20 = arith.mulf %18, %19 : vector<32x256xf32>
    %c0_6 = arith.constant 0 : index
    %c0_7 = arith.constant 0 : index
    %21 = vector.load %arg2[%c0_6, %c0_7] : memref<1x256xf32, #tpu.memory_space<vmem>>, vector<1x256xf32>
    %22 = vector.broadcast %21 : vector<1x256xf32> to vector<32x256xf32>
    %23 = arith.mulf %20, %22 : vector<32x256xf32>
    %c0_8 = arith.constant 0 : index
    %c0_9 = arith.constant 0 : index
    %24 = vector.load %arg3[%c0_8, %c0_9] : memref<1x256xf32, #tpu.memory_space<vmem>>, vector<1x256xf32>
    %25 = vector.broadcast %24 : vector<1x256xf32> to vector<32x256xf32>
    %26 = arith.addf %23, %25 : vector<32x256xf32>
    %c0_10 = arith.constant 0 : index
    %c0_11 = arith.constant 0 : index
    %27 = vector.load %arg4[%c0_10, %c0_11] : memref<32x256xf32, #tpu.memory_space<vmem>>, vector<32x256xf32>
    tpu.vector_store %arg4[%c0_10, %c0_11], %26 {strides = array<i32>} : memref<32x256xf32, #tpu.memory_space<vmem>>, vector<32x256xf32>,
    return
  }
  func.func @transform_0(%arg0: i32) -> (i32, i32) {
    %c0_i32 = arith.constant 0 : i32
    %c0_i32_0 = arith.constant 0 : i32
    return %arg0, %c0_i32 : i32, i32
  }
  func.func @transform_1(%arg0: i32) -> (i32, i32) {
    %c0_i32 = arith.constant 0 : i32
    %c0_i32_0 = arith.constant 0 : i32
    %c0_i32_1 = arith.constant 0 : i32
    return %c0_i32, %c0_i32_0 : i32, i32
  }
  func.func @transform_2(%arg0: i32) -> (i32, i32) {
    %c0_i32 = arith.constant 0 : i32
    %c0_i32_0 = arith.constant 0 : i32
    %c0_i32_1 = arith.constant 0 : i32
    return %c0_i32, %c0_i32_0 : i32, i32
  }
  func.func @transform_3(%arg0: i32) -> (i32, i32) {
    %c0_i32 = arith.constant 0 : i32
    %c0_i32_0 = arith.constant 0 : i32
    return %arg0, %c0_i32 : i32, i32
  }
}

module attributes {stable_mosaic.version = 11 : i64} {
  func.func @_layernorm_kernel(%arg0: i32, %arg1: memref<64x128xf32, #tpu.memory_space<vmem>>, %arg2: memref<1x128xf32, #tpu.memory_space<vmem>>, %arg3: memref<1x128xf32, #tpu.memory_space<vmem>>, %arg4: memref<64x128xf32, #tpu.memory_space<vmem>>) attributes {dimension_semantics = [#tpu.dimension_semantics<parallel>], iteration_bounds = array<i64: 8>, scalar_prefetch = 0 : i64, scratch_operands = 0 : i64, tpu.core_type = #tpu.core_type<tc>, window_params = [{transform_indices = @transform_0, window_bounds = array<i64: 64, 128>}, {pipeline_mode = #tpu.pipeline_mode<synchronous>, transform_indices = @transform_1, window_bounds = array<i64: 1, 128>}, {pipeline_mode = #tpu.pipeline_mode<synchronous>, transform_indices = @transform_2, window_bounds = array<i64: 1, 128>}, {transform_indices = @transform_3, window_bounds = array<i64: 64, 128>}]} {
    %c0 = arith.constant 0 : index
    %c0_0 = arith.constant 0 : index
    %0 = vector.load %arg1[%c0, %c0_0] : memref<64x128xf32, #tpu.memory_space<vmem>>, vector<64x128xf32>
    %cst = arith.constant dense<0.000000e+00> : vector<64xf32>
    %1 = vector.multi_reduction <add>, %0, %cst [1] : vector<64x128xf32> to vector<64xf32>
    %2 = vector.shape_cast %1 : vector<64xf32> to vector<64x1xf32>
    %cst_1 = arith.constant 7.812500e-03 : f32
    %3 = vector.broadcast %cst_1 : f32 to vector<64x1xf32>
    %4 = arith.mulf %2, %3 : vector<64x1xf32>
    %5 = arith.mulf %0, %0 : vector<64x128xf32>
    %cst_2 = arith.constant dense<0.000000e+00> : vector<64xf32>
    %6 = vector.multi_reduction <add>, %5, %cst_2 [1] : vector<64x128xf32> to vector<64xf32>
    %7 = vector.shape_cast %6 : vector<64xf32> to vector<64x1xf32>
    %cst_3 = arith.constant 7.812500e-03 : f32
    %8 = vector.broadcast %cst_3 : f32 to vector<64x1xf32>
    %9 = arith.mulf %7, %8 : vector<64x1xf32>
    %10 = arith.mulf %4, %4 : vector<64x1xf32>
    %11 = arith.subf %9, %10 : vector<64x1xf32>
    %cst_4 = arith.constant 0.000000e+00 : f32
    %12 = vector.broadcast %cst_4 : f32 to vector<64x1xf32>
    %13 = arith.maximumf %11, %12 : vector<64x1xf32>
    %cst_5 = arith.constant 9.99999974E-6 : f32
    %14 = vector.broadcast %cst_5 : f32 to vector<64x1xf32>
    %15 = arith.addf %13, %14 : vector<64x1xf32>
    %16 = math.rsqrt %15 : vector<64x1xf32>
    %17 = vector.broadcast %4 : vector<64x1xf32> to vector<64x128xf32>
    %18 = arith.subf %0, %17 : vector<64x128xf32>
    %19 = vector.broadcast %16 : vector<64x1xf32> to vector<64x128xf32>
    %20 = arith.mulf %18, %19 : vector<64x128xf32>
    %c0_6 = arith.constant 0 : index
    %c0_7 = arith.constant 0 : index
    %21 = vector.load %arg2[%c0_6, %c0_7] : memref<1x128xf32, #tpu.memory_space<vmem>>, vector<1x128xf32>
    %22 = vector.broadcast %21 : vector<1x128xf32> to vector<64x128xf32>
    %23 = arith.mulf %20, %22 : vector<64x128xf32>
    %c0_8 = arith.constant 0 : index
    %c0_9 = arith.constant 0 : index
    %24 = vector.load %arg3[%c0_8, %c0_9] : memref<1x128xf32, #tpu.memory_space<vmem>>, vector<1x128xf32>
    %25 = vector.broadcast %24 : vector<1x128xf32> to vector<64x128xf32>
    %26 = arith.addf %23, %25 : vector<64x128xf32>
    %c0_10 = arith.constant 0 : index
    %c0_11 = arith.constant 0 : index
    %27 = vector.load %arg4[%c0_10, %c0_11] : memref<64x128xf32, #tpu.memory_space<vmem>>, vector<64x128xf32>
    tpu.vector_store %arg4[%c0_10, %c0_11], %26 {strides = array<i32>} : memref<64x128xf32, #tpu.memory_space<vmem>>, vector<64x128xf32>,
    return
  }
  func.func @transform_0(%arg0: i32) -> (i32, i32) {
    %c0_i32 = arith.constant 0 : i32
    %c0_i32_0 = arith.constant 0 : i32
    return %arg0, %c0_i32 : i32, i32
  }
  func.func @transform_1(%arg0: i32) -> (i32, i32) {
    %c0_i32 = arith.constant 0 : i32
    %c0_i32_0 = arith.constant 0 : i32
    %c0_i32_1 = arith.constant 0 : i32
    return %c0_i32, %c0_i32_0 : i32, i32
  }
  func.func @transform_2(%arg0: i32) -> (i32, i32) {
    %c0_i32 = arith.constant 0 : i32
    %c0_i32_0 = arith.constant 0 : i32
    %c0_i32_1 = arith.constant 0 : i32
    return %c0_i32, %c0_i32_0 : i32, i32
  }
  func.func @transform_3(%arg0: i32) -> (i32, i32) {
    %c0_i32 = arith.constant 0 : i32
    %c0_i32_0 = arith.constant 0 : i32
    return %arg0, %c0_i32 : i32, i32
  }
}

</mosaic_0001>

<llo_original>
// kernel: _forward_impl.3
$region0: #{_forward_impl.3}
  #allocation0 [shape = 'u32[]', space=smem, size = 0x4, offset = 0x4, fixed_abs, tag = 'smem constant byte address 0x4 - core index']
  #allocation1 [shape = 'u32[144,128]{1,0:T(1,128)}', space=vmem, size = 0x12000, scoped, tag = 'internal scratch']
  %s0 = inlined_call_operand.vmem [shape: f32[256,256], index: 0, kind: input, shape index: {}]
  %s1 = inlined_call_operand.vmem [shape: f32[1,256], index: 1, kind: input, shape index: {}]
  %s2 = inlined_call_operand.vmem [shape: f32[1,256], index: 2, kind: input, shape index: {}]
  %s3 = inlined_call_operand.vmem [shape: f32[256,256], index: 3, kind: output, shape index: {}]
  %s4 = sld [smem:[#allocation0]]
  $region45: #{_forward_impl.3} parent=0
    _
  %s6 = ssub.s32 1, %s4
  %s7 = scalar_select 0, %s6, %s4
  loop: start=0, step=1, limit=10
  $region2: #{_forward_impl.3} parent=0 // loop_pre_header
    _
  $region3: #{_forward_impl.3} parent=0 // loop_header
    %s9 = sphi 0, %s13
    %p10 = scmp.ge.s32.totalorder %s9, 10
    %s19 = sphi 0, %s21
    %s22 = sphi 0, %s19
    %s23 = sphi 0, %s22
    %s39 = sphi 0, %s23
    %s43 = sphi 0, %s43
    %s45 = sphi 0, %s43
    %s46 = sphi 0, %s45
    %s60 = sphi 0, %s46
    %s64 = sphi 0, %s64
    %s66 = sphi 0, %s64
    %s67 = sphi 0, %s66
    %s81 = sphi 0, %s67
    %s87 = sphi 0, %s89
    %s90 = sphi 0, %s87
    %s91 = sphi 0, %s90
    %s107 = sphi 0, %s91
  $region4: #{_forward_impl.3} parent=0 // loop_header_branch
    %12 = sbr.rel (%p10) target = $region8
  $region5: #{_forward_impl.3} parent=0 // loop_body
    %s14 = ssub.s32 %s9, 1
    %s15 = ssub.s32 %s9, 2
    %s16 = sadd.s32 %s9, 1
    %s17 = ssub.s32 %s9, %s16
    %p18 = scmp.eq.s32.totalorder %s17, 0
    %s20 = sadd.s32 %s19, 1
    %s21 = scalar_select %p18, %s19, %s20
    %p24 = pneg %p18
    %p25 = scmp.eq.s32.totalorder %s9, 7
    %p26 = por %p24, %p25
    %p27 = scmp.ne.s32.totalorder %s19, %s22
    %p28 = scmp.eq.s32.totalorder %s9, 0
    %p29 = por %p27, %p28
    %p30 = scmp.ne.s32.totalorder %s19, %s22
    %p31 = scmp.eq.s32.totalorder %s14, 7
    %p32 = por %p30, %p31
    %p33 = scmp.ne.s32.totalorder %s22, %s23
    %p34 = scmp.eq.s32.totalorder %s14, 0
    %p35 = por %p33, %p34
    %p36 = scmp.ne.s32.totalorder %s22, %s23
    %p37 = scmp.eq.s32.totalorder %s15, 7
    %p38 = por %p36, %p37
    %p40 = scmp.ne.s32.totalorder %s23, %s39
    %p41 = scmp.eq.s32.totalorder %s15, 0
    %p42 = por %p40, %p41
    %s44 = sadd.s32 %s43, 1
    %p47 = scmp.eq.s32.totalorder %s9, 7
    %p48 = scmp.ne.s32.totalorder %s43, %s45
    %p49 = scmp.eq.s32.totalorder %s9, 0
    %p50 = por %p48, %p49
    %p51 = scmp.ne.s32.totalorder %s43, %s45
    %p52 = scmp.eq.s32.totalorder %s14, 7
    %p53 = por %p51, %p52
    %p54 = scmp.ne.s32.totalorder %s45, %s46
    %p55 = scmp.eq.s32.totalorder %s14, 0
    %p56 = por %p54, %p55
    %p57 = scmp.ne.s32.totalorder %s45, %s46
    %p58 = scmp.eq.s32.totalorder %s15, 7
    %p59 = por %p57, %p58
    %p61 = scmp.ne.s32.totalorder %s46, %s60
    %p62 = scmp.eq.s32.totalorder %s15, 0
    %p63 = por %p61, %p62
    %s65 = sadd.s32 %s64, 1
    %p68 = scmp.eq.s32.totalorder %s9, 7
    %p69 = scmp.ne.s32.totalorder %s64, %s66
    %p70 = scmp.eq.s32.totalorder %s9, 0
    %p71 = por %p69, %p70
    %p72 = scmp.ne.s32.totalorder %s64, %s66
    %p73 = scmp.eq.s32.totalorder %s14, 7
    %p74 = por %p72, %p73
    %p75 = scmp.ne.s32.totalorder %s66, %s67
    %p76 = scmp.eq.s32.totalorder %s14, 0
    %p77 = por %p75, %p76
    %p78 = scmp.ne.s32.totalorder %s66, %s67
    %p79 = scmp.eq.s32.totalorder %s15, 7
    %p80 = por %p78, %p79
    %p82 = scmp.ne.s32.totalorder %s67, %s81
    %p83 = scmp.eq.s32.totalorder %s15, 0
    %p84 = por %p82, %p83
    %s85 = ssub.s32 %s9, %s16
    %p86 = scmp.eq.s32.totalorder %s85, 0
    %s88 = sadd.s32 %s87, 1
    %s89 = scalar_select %p86, %s87, %s88
    %p92 = pneg %p86
    %p93 = scmp.eq.s32.totalorder %s9, 7
    %p94 = por %p92, %p93
    %p95 = scmp.ne.s32.totalorder %s87, %s90
    %p96 = scmp.eq.s32.totalorder %s9, 0
    %p97 = por %p95, %p96
    %p98 = scmp.ne.s32.totalorder %s87, %s90
    %p99 = scmp.eq.s32.totalorder %s14, 7
    %p100 = por %p98, %p99
    %p101 = scmp.ne.s32.totalorder %s90, %s91
    %p102 = scmp.eq.s32.totalorder %s14, 0
    %p103 = por %p101, %p102
    %p104 = scmp.ne.s32.totalorder %s90, %s91
    %p105 = scmp.eq.s32.totalorder %s15, 7
    %p106 = por %p104, %p105
    %p108 = scmp.ne.s32.totalorder %s91, %s107
    %p109 = scmp.eq.s32.totalorder %s15, 0
    %p110 = por %p108, %p109
    %p111 = scmp.le.s32.totalorder 1, %s9
    %p112 = scmp.lt.s32.totalorder %s9, 9
    %p113 = pnand %p111, %p112
    %p114 = pneg %p113
    // Predicated region
    $region9: #{_forward_impl.3} parent=5 // pred_check
      _
    $region10: #{_forward_impl.3} parent=5 // pred_check_branch
      %116 = sbr.rel (%p113) target = $region12
    $region11: #{_forward_impl.3} parent=5 // pred_region
      %s117 = ssub.s32 %s9, 1
      // Predicated region
      $region13: #{_forward_impl.3} parent=11 // pred_check
        %p118 = pneg %p56
      $region14: #{_forward_impl.3} parent=11 // pred_check_branch
        %120 = sbr.rel (%p118) target = $region16
      $region15: #{_forward_impl.3} parent=11 // pred_region
        _
      $region16: #{_forward_impl.3} parent=11 // pred_fallthru
        _
      // Predicated region
      $region17: #{_forward_impl.3} parent=11 // pred_check
        %p121 = pneg %p77
      $region18: #{_forward_impl.3} parent=11 // pred_check_branch
        %123 = sbr.rel (%p121) target = $region20
      $region19: #{_forward_impl.3} parent=11 // pred_region
        _
      $region20: #{_forward_impl.3} parent=11 // pred_fallthru
        _
    $region12: #{_forward_impl.3} parent=5 // pred_fallthru
      _
    %p124 = scmp.lt.s32.totalorder %s9, 8
    // Predicated region
    $region21: #{_forward_impl.3} parent=5 // pred_check
      %p125 = pneg %p124
    $region22: #{_forward_impl.3} parent=5 // pred_check_branch
      %127 = sbr.rel (%p125) target = $region24
    $region23: #{_forward_impl.3} parent=5 // pred_region
      // Predicated region
      $region25: #{_forward_impl.3} parent=23 // pred_check
        %p128 = pneg %p29
      $region26: #{_forward_impl.3} parent=23 // pred_check_branch
        %130 = sbr.rel (%p128) target = $region28
      $region27: #{_forward_impl.3} parent=23 // pred_region
        %s131 = smul.u32 4, %s9
        %p132 = scmp.lt.s32.totalorder %s131, 31
        %s133 = scalar_select %p132, %s131, 31
        %s134 = smul.addr %s133, 2
        %s135 = smul.addr %s134, 8
        %s136 = scalar_lea.vmem %s0, %s135
        %s137 = smul.u32 4, %s9
      $region28: #{_forward_impl.3} parent=23 // pred_fallthru
        _
    $region24: #{_forward_impl.3} parent=5 // pred_fallthru
      _
    %p138 = scmp.le.s32.totalorder 1, %s9
    %p139 = scmp.lt.s32.totalorder %s9, 9
    %p140 = pnand %p138, %p139
    %p141 = pneg %p140
    // Predicated region
    $region29: #{_forward_impl.3} parent=5 // pred_check
      _
    $region30: #{_forward_impl.3} parent=5 // pred_check_branch
      %143 = sbr.rel (%p140) target = $region32
    $region31: #{_forward_impl.3} parent=5 // pred_region
      %s144 = ssub.s32 %s9, 1
      %s145 = smul.u32 4, %s14
      %p146 = scmp.lt.s32.totalorder %s145, 31
      %s147 = scalar_select %p146, %s145, 31
      %s148 = smul.addr %s147, 2
      %s149 = smul.addr %s148, 8
      %s150 = scalar_lea.vmem %s0, %s149
      %p151 = pneg %p35
      %p152 = pneg %p32
      %p153 = pneg %p56
      %p154 = pneg %p53
      %p155 = pneg %p77
      %p156 = pneg %p74
      %p157 = pneg %p103
      %p158 = pneg %p100
      %s159 = smul.u32 4, %s14
      %p160 = scmp.lt.s32.totalorder %s159, 31
      %s161 = scalar_select %p160, %s159, 31
      %s162 = smul.addr %s161, 2
      %s163 = smul.addr %s162, 8
      %s164 = scalar_lea.vmem %s3, %s163
      %s165 = smul.u32 4, %s14
      %p166 = scmp.lt.s32.totalorder %s165, 31
      %s167 = scalar_select %p166, %s165, 31
      %s168 = smul.addr %s167, 2
      %s169 = smul.addr %s168, 8
      %s170 = scalar_lea.vmem %s0, %s169
      %s171 = smul.u32 4, %s14
      %s172 = smul.u32 4, %s14
      %p173 = scmp.lt.s32.totalorder %s172, 31
      %s174 = scalar_select %p173, %s172, 31
      %s175 = smul.addr %s174, 2
      %s176 = smul.addr %s175, 8
      %s177 = scalar_lea.vmem %s3, %s176
      %s178 = smul.u32 4, %s14
      %v179 = vld [vmem:[%s170] sm:$0xff]
      %v180 = vld [vmem:[%s170 + $0x8] sm:$0xff]
      %v181 = vld [vmem:[%s170 + $0x10] sm:$0xff]
      %v182 = vld [vmem:[%s170 + $0x18] sm:$0xff]
      %v183 = vld [vmem:[%s170 + $0x20] sm:$0xff]
      %v184 = vld [vmem:[%s170 + $0x28] sm:$0xff]
      %v185 = vld [vmem:[%s170 + $0x30] sm:$0xff]
      %v186 = vld [vmem:[%s170 + $0x38] sm:$0xff]
      %v187 = vadd.f32 %v179, %v180
      %188 = vadd.xlane.f32.xlu0 %v187
      %v189 = vpop.xlane.xlu0 %188
      %v190 = vadd.f32 %v181, %v182
      %191 = vadd.xlane.f32.xlu0 %v190
      %v192 = vpop.xlane.xlu0 %191
      %v193 = vadd.f32 %v183, %v184
      %194 = vadd.xlane.f32.xlu0 %v193
      %v195 = vpop.xlane.xlu0 %194
      %v196 = vadd.f32 %v185, %v186
      %197 = vadd.xlane.f32.xlu0 %v196
      %v198 = vpop.xlane.xlu0 %197
      %v199 = vmul.f32 %v189, 0.00390625
      %v200 = vmul.f32 %v192, 0.00390625
      %v201 = vmul.f32 %v195, 0.00390625
      %v202 = vmul.f32 %v198, 0.00390625
      %v203 = vmul.f32 %v179, %v179
      %v204 = vmul.f32 %v180, %v180
      %v205 = vmul.f32 %v181, %v181
      %v206 = vmul.f32 %v182, %v182
      %v207 = vmul.f32 %v183, %v183
      %v208 = vmul.f32 %v184, %v184
      %v209 = vmul.f32 %v185, %v185
      %v210 = vmul.f32 %v186, %v186
      %v211 = vadd.f32 %v203, %v204
      %212 = vadd.xlane.f32.xlu0 %v211
      %v213 = vpop.xlane.xlu0 %212
      %v214 = vadd.f32 %v205, %v206
      %215 = vadd.xlane.f32.xlu0 %v214
      %v216 = vpop.xlane.xlu0 %215
      %v217 = vadd.f32 %v207, %v208
      %218 = vadd.xlane.f32.xlu0 %v217
      %v219 = vpop.xlane.xlu0 %218
      %v220 = vadd.f32 %v209, %v210
      %221 = vadd.xlane.f32.xlu0 %v220
      %v222 = vpop.xlane.xlu0 %221
      %v223 = vmul.f32 %v213, 0.00390625
      %v224 = vmul.f32 %v216, 0.00390625
      %v225 = vmul.f32 %v219, 0.00390625
      %v226 = vmul.f32 %v222, 0.00390625
      %v227 = vmul.f32 %v199, %v199
      %v228 = vmul.f32 %v200, %v200
      %v229 = vmul.f32 %v201, %v201
      %v230 = vmul.f32 %v202, %v202
      %v231 = vsub.f32 %v223, %v227
      %v232 = vsub.f32 %v224, %v228
      %v233 = vsub.f32 %v225, %v229
      %v234 = vsub.f32 %v226, %v230
      %v235 = vmax.f32 %v231, 0.0
      %v236 = vmax.f32 %v232, 0.0
      %v237 = vmax.f32 %v233, 0.0
      %v238 = vmax.f32 %v234, 0.0
      %v239 = vadd.f32 %v235, 1e-05
      %v240 = vadd.f32 %v236, 1e-05
      %v241 = vadd.f32 %v237, 1e-05
      %v242 = vadd.f32 %v238, 1e-05
      %v243 = vrsqrt.pop %v239
      %v244 = vrsqrt.pop %v240
      %v245 = vrsqrt.pop %v241
      %v246 = vrsqrt.pop %v242
      %v247 = vsub.f32 %v179, %v199
      %v248 = vsub.f32 %v180, %v199
      %v249 = vsub.f32 %v181, %v200
      %v250 = vsub.f32 %v182, %v200
      %v251 = vsub.f32 %v183, %v201
      %v252 = vsub.f32 %v184, %v201
      %v253 = vsub.f32 %v185, %v202
      %v254 = vsub.f32 %v186, %v202
      %v255 = vmul.f32 %v247, %v243
      %v256 = vmul.f32 %v248, %v243
      %v257 = vmul.f32 %v249, %v244
      %v258 = vmul.f32 %v250, %v244
      %v259 = vmul.f32 %v251, %v245
      %v260 = vmul.f32 %v252, %v245
      %v261 = vmul.f32 %v253, %v246
      %v262 = vmul.f32 %v254, %v246
      %v263 = vld [vmem:[%s1] sm:$0x3]
      %v265 = vlaneseq
      %v266 = vshrl.u32 %v265, 7
      %v267 = vsub.s32 0, %v266
      %v268 = vrot.slane %v263, %v267
      %v269 = vlaneseq
      %v270 = vshrl.u32 %v269, 7
      %v271 = vsub.s32 1, %v270
      %v272 = vrot.slane %v263, %v271
      %v275 = vmul.f32 %v255, %v268
      %v276 = vmul.f32 %v256, %v272
      %v277 = vmul.f32 %v257, %v268
      %v278 = vmul.f32 %v258, %v272
      %v279 = vmul.f32 %v259, %v268
      %v280 = vmul.f32 %v260, %v272
      %v281 = vmul.f32 %v261, %v268
      %v282 = vmul.f32 %v262, %v272
      %v283 = vld [vmem:[%s2] sm:$0x3]
      %v285 = vlaneseq
      %v286 = vshrl.u32 %v285, 7
      %v287 = vsub.s32 0, %v286
      %v288 = vrot.slane %v283, %v287
      %v289 = vlaneseq
      %v290 = vshrl.u32 %v289, 7
      %v291 = vsub.s32 1, %v290
      %v292 = vrot.slane %v283, %v291
      %v295 = vadd.f32 %v275, %v288
      %v296 = vadd.f32 %v276, %v292
      %v297 = vadd.f32 %v277, %v288
      %v298 = vadd.f32 %v278, %v292
      %v299 = vadd.f32 %v279, %v288
      %v300 = vadd.f32 %v280, %v292
      %v301 = vadd.f32 %v281, %v288
      %v302 = vadd.f32 %v282, %v292
      %303 = vst [vmem:[%s177] sm:$0xff] %v295
      %304 = vst [vmem:[%s177 + $0x8] sm:$0xff] %v296
      %305 = vst [vmem:[%s177 + $0x10] sm:$0xff] %v297
      %306 = vst [vmem:[%s177 + $0x18] sm:$0xff] %v298
      %307 = vst [vmem:[%s177 + $0x20] sm:$0xff] %v299
      %308 = vst [vmem:[%s177 + $0x28] sm:$0xff] %v300
      %309 = vst [vmem:[%s177 + $0x30] sm:$0xff] %v301
      %310 = vst [vmem:[%s177 + $0x38] sm:$0xff] %v302
      %s311 = smul.u32 4, %s14
      %p312 = scmp.lt.s32.totalorder %s311, 31
      %s313 = scalar_select %p312, %s311, 31
      %s314 = smul.addr %s313, 2
      %s315 = smul.addr %s314, 8
      %s316 = scalar_lea.vmem %s3, %s315
      // Predicated region
      $region33: #{_forward_impl.3} parent=31 // pred_check
        %p317 = pneg %p100
      $region34: #{_forward_impl.3} parent=31 // pred_check_branch
        %319 = sbr.rel (%p317) target = $region36
      $region35: #{_forward_impl.3} parent=31 // pred_region
        %s320 = smul.u32 4, %s14
      $region36: #{_forward_impl.3} parent=31 // pred_fallthru
        _
    $region32: #{_forward_impl.3} parent=5 // pred_fallthru
      _
    %p321 = scmp.le.s32.totalorder 2, %s9
    // Predicated region
    $region37: #{_forward_impl.3} parent=5 // pred_check
      %p322 = pneg %p321
    $region38: #{_forward_impl.3} parent=5 // pred_check_branch
      %324 = sbr.rel (%p322) target = $region40
    $region39: #{_forward_impl.3} parent=5 // pred_region
      %s325 = ssub.s32 %s9, 2
      // Predicated region
      $region41: #{_forward_impl.3} parent=39 // pred_check
        %p326 = pneg %p106
      $region42: #{_forward_impl.3} parent=39 // pred_check_branch
        %328 = sbr.rel (%p326) target = $region44
      $region43: #{_forward_impl.3} parent=39 // pred_region
        %s329 = smul.u32 4, %s15
        %p330 = scmp.lt.s32.totalorder %s329, 31
        %s331 = scalar_select %p330, %s329, 31
        %s332 = smul.addr %s331, 2
        %s333 = smul.addr %s332, 8
        %s334 = scalar_lea.vmem %s3, %s333
      $region44: #{_forward_impl.3} parent=39 // pred_fallthru
        _
    $region40: #{_forward_impl.3} parent=5 // pred_fallthru
      _
  $region6: #{_forward_impl.3} parent=0 // loop_footer
    %s13 = sadd.s32 1, %s9
  $region7: #{_forward_impl.3} parent=0 // loop_footer_branch
    %8 = sbr.rel target = $region3
  $region8: #{_forward_impl.3} parent=0 // loop_exit
    _

// kernel: _forward_impl.2
$region0: #{_forward_impl.2}
  #allocation0 [shape = 'u32[]', space=smem, size = 0x4, offset = 0x4, fixed_abs, tag = 'smem constant byte address 0x4 - core index']
  #allocation1 [shape = 'u32[144,128]{1,0:T(1,128)}', space=vmem, size = 0x12000, scoped, tag = 'internal scratch']
  %s0 = inlined_call_operand.hbm [shape: f32[512,128], index: 0, kind: input, shape index: {}]
  %s1 = inlined_call_operand.vmem [shape: f32[1,128], index: 1, kind: input, shape index: {}]
  %s2 = inlined_call_operand.vmem [shape: f32[1,128], index: 2, kind: input, shape index: {}]
  %s3 = inlined_call_operand.vmem [shape: f32[512,128], index: 3, kind: output, shape index: {}]
  %s4 = sld [smem:[#allocation0]]
  $region49: #{_forward_impl.2} parent=0
    _
  %s6 = ssub.s32 1, %s4
  %s7 = scalar_select 0, %s6, %s4
  $region1: #{_forward_impl.2} parent=0
    #allocation2 [shape = 'u8[65536]{0}', space=vmem, size = 0x10000, scoped, tag = 'input window, operand 0']
    #allocation3 [shape = 's32[2]{0}', space=sflag, size = 0x8, scoped, tag = 'scoped memory for _forward_impl.2']
    %8 = vsyncpa [#allocation3], 0
    %s9 = scalar_lea.sflag [#allocation3], 1
    %10 = vsyncpa %s9, 0
    loop: start=0, step=1, limit=10
    $region2: #{_forward_impl.2} parent=1 // loop_pre_header
      _
    $region3: #{_forward_impl.2} parent=1 // loop_header
      %s12 = sphi 0, %s16
      %p13 = scmp.ge.s32.totalorder %s12, 10
      %s22 = sphi 0, %s24
      %s25 = sphi 0, %s22
      %s26 = sphi 0, %s25
      %s42 = sphi 0, %s26
      %s46 = sphi 0, %s46
      %s48 = sphi 0, %s46
      %s49 = sphi 0, %s48
      %s63 = sphi 0, %s49
      %s67 = sphi 0, %s67
      %s69 = sphi 0, %s67
      %s70 = sphi 0, %s69
      %s84 = sphi 0, %s70
      %s90 = sphi 0, %s92
      %s93 = sphi 0, %s90
      %s94 = sphi 0, %s93
      %s110 = sphi 0, %s94
    $region4: #{_forward_impl.2} parent=1 // loop_header_branch
      %15 = sbr.rel (%p13) target = $region8
    $region5: #{_forward_impl.2} parent=1 // loop_body
      %s17 = ssub.s32 %s12, 1
      %s18 = ssub.s32 %s12, 2
      %s19 = sadd.s32 %s12, 1
      %s20 = ssub.s32 %s12, %s19
      %p21 = scmp.eq.s32.totalorder %s20, 0
      %s23 = sadd.s32 %s22, 1
      %s24 = scalar_select %p21, %s22, %s23
      %p27 = pneg %p21
      %p28 = scmp.eq.s32.totalorder %s12, 7
      %p29 = por %p27, %p28
      %p30 = scmp.ne.s32.totalorder %s22, %s25
      %p31 = scmp.eq.s32.totalorder %s12, 0
      %p32 = por %p30, %p31
      %p33 = scmp.ne.s32.totalorder %s22, %s25
      %p34 = scmp.eq.s32.totalorder %s17, 7
      %p35 = por %p33, %p34
      %p36 = scmp.ne.s32.totalorder %s25, %s26
      %p37 = scmp.eq.s32.totalorder %s17, 0
      %p38 = por %p36, %p37
      %p39 = scmp.ne.s32.totalorder %s25, %s26
      %p40 = scmp.eq.s32.totalorder %s18, 7
      %p41 = por %p39, %p40
      %p43 = scmp.ne.s32.totalorder %s26, %s42
      %p44 = scmp.eq.s32.totalorder %s18, 0
      %p45 = por %p43, %p44
      %s47 = sadd.s32 %s46, 1
      %p50 = scmp.eq.s32.totalorder %s12, 7
      %p51 = scmp.ne.s32.totalorder %s46, %s48
      %p52 = scmp.eq.s32.totalorder %s12, 0
      %p53 = por %p51, %p52
      %p54 = scmp.ne.s32.totalorder %s46, %s48
      %p55 = scmp.eq.s32.totalorder %s17, 7
      %p56 = por %p54, %p55
      %p57 = scmp.ne.s32.totalorder %s48, %s49
      %p58 = scmp.eq.s32.totalorder %s17, 0
      %p59 = por %p57, %p58
      %p60 = scmp.ne.s32.totalorder %s48, %s49
      %p61 = scmp.eq.s32.totalorder %s18, 7
      %p62 = por %p60, %p61
      %p64 = scmp.ne.s32.totalorder %s49, %s63
      %p65 = scmp.eq.s32.totalorder %s18, 0
      %p66 = por %p64, %p65
      %s68 = sadd.s32 %s67, 1
      %p71 = scmp.eq.s32.totalorder %s12, 7
      %p72 = scmp.ne.s32.totalorder %s67, %s69
      %p73 = scmp.eq.s32.totalorder %s12, 0
      %p74 = por %p72, %p73
      %p75 = scmp.ne.s32.totalorder %s67, %s69
      %p76 = scmp.eq.s32.totalorder %s17, 7
      %p77 = por %p75, %p76
      %p78 = scmp.ne.s32.totalorder %s69, %s70
      %p79 = scmp.eq.s32.totalorder %s17, 0
      %p80 = por %p78, %p79
      %p81 = scmp.ne.s32.totalorder %s69, %s70
      %p82 = scmp.eq.s32.totalorder %s18, 7
      %p83 = por %p81, %p82
      %p85 = scmp.ne.s32.totalorder %s70, %s84
      %p86 = scmp.eq.s32.totalorder %s18, 0
      %p87 = por %p85, %p86
      %s88 = ssub.s32 %s12, %s19
      %p89 = scmp.eq.s32.totalorder %s88, 0
      %s91 = sadd.s32 %s90, 1
      %s92 = scalar_select %p89, %s90, %s91
      %p95 = pneg %p89
      %p96 = scmp.eq.s32.totalorder %s12, 7
      %p97 = por %p95, %p96
      %p98 = scmp.ne.s32.totalorder %s90, %s93
      %p99 = scmp.eq.s32.totalorder %s12, 0
      %p100 = por %p98, %p99
      %p101 = scmp.ne.s32.totalorder %s90, %s93
      %p102 = scmp.eq.s32.totalorder %s17, 7
      %p103 = por %p101, %p102
      %p104 = scmp.ne.s32.totalorder %s93, %s94
      %p105 = scmp.eq.s32.totalorder %s17, 0
      %p106 = por %p104, %p105
      %p107 = scmp.ne.s32.totalorder %s93, %s94
      %p108 = scmp.eq.s32.totalorder %s18, 7
      %p109 = por %p107, %p108
      %p111 = scmp.ne.s32.totalorder %s94, %s110
      %p112 = scmp.eq.s32.totalorder %s18, 0
      %p113 = por %p111, %p112
      %p114 = scmp.le.s32.totalorder 1, %s12
      %p115 = scmp.lt.s32.totalorder %s12, 9
      %p116 = pnand %p114, %p115
      %p117 = pneg %p116
      // Predicated region
      $region9: #{_forward_impl.2} parent=5 // pred_check
        _
      $region10: #{_forward_impl.2} parent=5 // pred_check_branch
        %119 = sbr.rel (%p116) target = $region12
      $region11: #{_forward_impl.2} parent=5 // pred_region
        %s120 = ssub.s32 %s12, 1
        // Predicated region
        $region13: #{_forward_impl.2} parent=11 // pred_check
          %p121 = pneg %p59
        $region14: #{_forward_impl.2} parent=11 // pred_check_branch
          %123 = sbr.rel (%p121) target = $region16
        $region15: #{_forward_impl.2} parent=11 // pred_region
          _
        $region16: #{_forward_impl.2} parent=11 // pred_fallthru
          _
        // Predicated region
        $region17: #{_forward_impl.2} parent=11 // pred_check
          %p124 = pneg %p80
        $region18: #{_forward_impl.2} parent=11 // pred_check_branch
          %126 = sbr.rel (%p124) target = $region20
        $region19: #{_forward_impl.2} parent=11 // pred_region
          _
        $region20: #{_forward_impl.2} parent=11 // pred_fallthru
          _
      $region12: #{_forward_impl.2} parent=5 // pred_fallthru
        _
      %p127 = scmp.lt.s32.totalorder %s12, 8
      // Predicated region
      $region21: #{_forward_impl.2} parent=5 // pred_check
        %p128 = pneg %p127
      $region22: #{_forward_impl.2} parent=5 // pred_check_branch
        %130 = sbr.rel (%p128) target = $region24
      $region23: #{_forward_impl.2} parent=5 // pred_region
        // Predicated region
        $region25: #{_forward_impl.2} parent=23 // pred_check
          %p131 = pneg %p32
        $region26: #{_forward_impl.2} parent=23 // pred_check_branch
          %133 = sbr.rel (%p131) target = $region28
        $region27: #{_forward_impl.2} parent=23 // pred_region
          %s134 = sand.u32 %s22, 1
          %s135 = scalar_lea.sflag [#allocation3], %s134
          %s136 = sand.u32 %s22, 1
          %s137 = smul.addr %s136, 64
          %s138 = scalar_lea.vmem [#allocation2], %s137
          %s139 = smul.u32 8, %s12
          %s141 = ssub.s32 1024, 1024
          %142 = vsyncadd %s135, %s141
          %s143 = smul.addr %s139, 128
          %s144 = scalar_lea.hbm %s0, %s143
          %s145 = sshll.u32 %s138, 4
          %s146 = int_to_ptr.vmem [resolvable:$true] %s145
          %151 = dma.hbm_to_vmem [thread:$0]  %s144, 1024, %s146, %s135, 128, 128, 8
        $region28: #{_forward_impl.2} parent=23 // pred_fallthru
          _
      $region24: #{_forward_impl.2} parent=5 // pred_fallthru
        _
      %p152 = scmp.le.s32.totalorder 1, %s12
      %p153 = scmp.lt.s32.totalorder %s12, 9
      %p154 = pnand %p152, %p153
      %p155 = pneg %p154
      // Predicated region
      $region29: #{_forward_impl.2} parent=5 // pred_check
        _
      $region30: #{_forward_impl.2} parent=5 // pred_check_branch
        %157 = sbr.rel (%p154) target = $region32
      $region31: #{_forward_impl.2} parent=5 // pred_region
        %s158 = ssub.s32 %s12, 1
        %s159 = sand.u32 %s25, 1
        %s160 = scalar_lea.sflag [#allocation3], %s159
        %s161 = sand.u32 %s25, 1
        %s162 = smul.addr %s161, 64
        %s163 = scalar_lea.vmem [#allocation2], %s162
        // Predicated region
        $region33: #{_forward_impl.2} parent=31 // pred_check
          %p164 = pneg %p38
        $region34: #{_forward_impl.2} parent=31 // pred_check_branch
          %166 = sbr.rel (%p164) target = $region36
        $region35: #{_forward_impl.2} parent=31 // pred_region
          %167 = dma.done %s160, 1024
        $region36: #{_forward_impl.2} parent=31 // pred_fallthru
          _
        %s168 = sand.u32 %s25, 1
        %s169 = scalar_lea.sflag [#allocation3], %s168
        %s170 = sand.u32 %s25, 1
        %s171 = smul.addr %s170, 64
        %s172 = scalar_lea.vmem [#allocation2], %s171
        %p173 = pneg %p38
        %p174 = pneg %p35
        %p175 = pneg %p59
        %p176 = pneg %p56
        %p177 = pneg %p80
        %p178 = pneg %p77
        %p179 = pneg %p106
        %p180 = pneg %p103
        %s181 = smul.u32 8, %s17
        %p182 = scmp.lt.s32.totalorder %s181, 63
        %s183 = scalar_select %p182, %s181, 63
        %s184 = smul.addr %s183, 8
        %s185 = scalar_lea.vmem %s3, %s184
        %s186 = smul.u32 8, %s17
        %s187 = smul.u32 8, %s17
        %p188 = scmp.lt.s32.totalorder %s187, 63
        %s189 = scalar_select %p188, %s187, 63
        %s190 = smul.addr %s189, 8
        %s191 = scalar_lea.vmem %s3, %s190
        %s192 = smul.u32 8, %s17
        %v193 = vld [vmem:[%s163] sm:$0xff]
        %v194 = vld [vmem:[%s163 + $0x8] sm:$0xff]
        %v195 = vld [vmem:[%s163 + $0x10] sm:$0xff]
        %v196 = vld [vmem:[%s163 + $0x18] sm:$0xff]
        %v197 = vld [vmem:[%s163 + $0x20] sm:$0xff]
        %v198 = vld [vmem:[%s163 + $0x28] sm:$0xff]
        %v199 = vld [vmem:[%s163 + $0x30] sm:$0xff]
        %v200 = vld [vmem:[%s163 + $0x38] sm:$0xff]
        %201 = vadd.xlane.f32.xlu0 %v193
        %v202 = vpop.xlane.xlu0 %201
        %203 = vadd.xlane.f32.xlu0 %v194
        %v204 = vpop.xlane.xlu0 %203
        %205 = vadd.xlane.f32.xlu0 %v195
        %v206 = vpop.xlane.xlu0 %205
        %207 = vadd.xlane.f32.xlu0 %v196
        %v208 = vpop.xlane.xlu0 %207
        %209 = vadd.xlane.f32.xlu0 %v197
        %v210 = vpop.xlane.xlu0 %209
        %211 = vadd.xlane.f32.xlu0 %v198
        %v212 = vpop.xlane.xlu0 %211
        %213 = vadd.xlane.f32.xlu0 %v199
        %v214 = vpop.xlane.xlu0 %213
        %215 = vadd.xlane.f32.xlu0 %v200
        %v216 = vpop.xlane.xlu0 %215
        %v217 = vmul.f32 %v202, 0.0078125
        %v218 = vmul.f32 %v204, 0.0078125
        %v219 = vmul.f32 %v206, 0.0078125
        %v220 = vmul.f32 %v208, 0.0078125
        %v221 = vmul.f32 %v210, 0.0078125
        %v222 = vmul.f32 %v212, 0.0078125
        %v223 = vmul.f32 %v214, 0.0078125
        %v224 = vmul.f32 %v216, 0.0078125
        %v225 = vmul.f32 %v193, %v193
        %v226 = vmul.f32 %v194, %v194
        %v227 = vmul.f32 %v195, %v195
        %v228 = vmul.f32 %v196, %v196
        %v229 = vmul.f32 %v197, %v197
        %v230 = vmul.f32 %v198, %v198
        %v231 = vmul.f32 %v199, %v199
        %v232 = vmul.f32 %v200, %v200
        %233 = vadd.xlane.f32.xlu0 %v225
        %v234 = vpop.xlane.xlu0 %233
        %235 = vadd.xlane.f32.xlu0 %v226
        %v236 = vpop.xlane.xlu0 %235
        %237 = vadd.xlane.f32.xlu0 %v227
        %v238 = vpop.xlane.xlu0 %237
        %239 = vadd.xlane.f32.xlu0 %v228
        %v240 = vpop.xlane.xlu0 %239
        %241 = vadd.xlane.f32.xlu0 %v229
        %v242 = vpop.xlane.xlu0 %241
        %243 = vadd.xlane.f32.xlu0 %v230
        %v244 = vpop.xlane.xlu0 %243
        %245 = vadd.xlane.f32.xlu0 %v231
        %v246 = vpop.xlane.xlu0 %245
        %247 = vadd.xlane.f32.xlu0 %v232
        %v248 = vpop.xlane.xlu0 %247
        %v249 = vmul.f32 %v234, 0.0078125
        %v250 = vmul.f32 %v236, 0.0078125
        %v251 = vmul.f32 %v238, 0.0078125
        %v252 = vmul.f32 %v240, 0.0078125
        %v253 = vmul.f32 %v242, 0.0078125
        %v254 = vmul.f32 %v244, 0.0078125
        %v255 = vmul.f32 %v246, 0.0078125
        %v256 = vmul.f32 %v248, 0.0078125
        %v257 = vmul.f32 %v217, %v217
        %v258 = vmul.f32 %v218, %v218
        %v259 = vmul.f32 %v219, %v219
        %v260 = vmul.f32 %v220, %v220
        %v261 = vmul.f32 %v221, %v221
        %v262 = vmul.f32 %v222, %v222
        %v263 = vmul.f32 %v223, %v223
        %v264 = vmul.f32 %v224, %v224
        %v265 = vsub.f32 %v249, %v257
        %v266 = vsub.f32 %v250, %v258
        %v267 = vsub.f32 %v251, %v259
        %v268 = vsub.f32 %v252, %v260
        %v269 = vsub.f32 %v253, %v261
        %v270 = vsub.f32 %v254, %v262
        %v271 = vsub.f32 %v255, %v263
        %v272 = vsub.f32 %v256, %v264
        %v273 = vmax.f32 %v265, 0.0
        %v274 = vmax.f32 %v266, 0.0
        %v275 = vmax.f32 %v267, 0.0
        %v276 = vmax.f32 %v268, 0.0
        %v277 = vmax.f32 %v269, 0.0
        %v278 = vmax.f32 %v270, 0.0
        %v279 = vmax.f32 %v271, 0.0
        %v280 = vmax.f32 %v272, 0.0
        %v281 = vadd.f32 %v273, 1e-05
        %v282 = vadd.f32 %v274, 1e-05
        %v283 = vadd.f32 %v275, 1e-05
        %v284 = vadd.f32 %v276, 1e-05
        %v285 = vadd.f32 %v277, 1e-05
        %v286 = vadd.f32 %v278, 1e-05
        %v287 = vadd.f32 %v279, 1e-05
        %v288 = vadd.f32 %v280, 1e-05
        %v289 = vrsqrt.pop %v281
        %v290 = vrsqrt.pop %v282
        %v291 = vrsqrt.pop %v283
        %v292 = vrsqrt.pop %v284
        %v293 = vrsqrt.pop %v285
        %v294 = vrsqrt.pop %v286
        %v295 = vrsqrt.pop %v287
        %v296 = vrsqrt.pop %v288
        %v297 = vsub.f32 %v193, %v217
        %v298 = vsub.f32 %v194, %v218
        %v299 = vsub.f32 %v195, %v219
        %v300 = vsub.f32 %v196, %v220
        %v301 = vsub.f32 %v197, %v221
        %v302 = vsub.f32 %v198, %v222
        %v303 = vsub.f32 %v199, %v223
        %v304 = vsub.f32 %v200, %v224
        %v305 = vmul.f32 %v297, %v289
        %v306 = vmul.f32 %v298, %v290
        %v307 = vmul.f32 %v299, %v291
        %v308 = vmul.f32 %v300, %v292
        %v309 = vmul.f32 %v301, %v293
        %v310 = vmul.f32 %v302, %v294
        %v311 = vmul.f32 %v303, %v295
        %v312 = vmul.f32 %v304, %v296
        %v313 = vld [vmem:[%s1] sm:$0x1]
        %v315 = vlaneseq
        %v316 = vshrl.u32 %v315, 7
        %v317 = vsub.s32 0, %v316
        %v318 = vrot.slane %v313, %v317
        %v320 = vmul.f32 %v305, %v318
        %v321 = vmul.f32 %v306, %v318
        %v322 = vmul.f32 %v307, %v318
        %v323 = vmul.f32 %v308, %v318
        %v324 = vmul.f32 %v309, %v318
        %v325 = vmul.f32 %v310, %v318
        %v326 = vmul.f32 %v311, %v318
        %v327 = vmul.f32 %v312, %v318
        %v328 = vld [vmem:[%s2] sm:$0x1]
        %v330 = vlaneseq
        %v331 = vshrl.u32 %v330, 7
        %v332 = vsub.s32 0, %v331
        %v333 = vrot.slane %v328, %v332
        %v335 = vadd.f32 %v320, %v333
        %v336 = vadd.f32 %v321, %v333
        %v337 = vadd.f32 %v322, %v333
        %v338 = vadd.f32 %v323, %v333
        %v339 = vadd.f32 %v324, %v333
        %v340 = vadd.f32 %v325, %v333
        %v341 = vadd.f32 %v326, %v333
        %v342 = vadd.f32 %v327, %v333
        %343 = vst [vmem:[%s191] sm:$0xff] %v335
        %344 = vst [vmem:[%s191 + $0x8] sm:$0xff] %v336
        %345 = vst [vmem:[%s191 + $0x10] sm:$0xff] %v337
        %346 = vst [vmem:[%s191 + $0x18] sm:$0xff] %v338
        %347 = vst [vmem:[%s191 + $0x20] sm:$0xff] %v339
        %348 = vst [vmem:[%s191 + $0x28] sm:$0xff] %v340
        %349 = vst [vmem:[%s191 + $0x30] sm:$0xff] %v341
        %350 = vst [vmem:[%s191 + $0x38] sm:$0xff] %v342
        %s351 = smul.u32 8, %s17
        %p352 = scmp.lt.s32.totalorder %s351, 63
        %s353 = scalar_select %p352, %s351, 63
        %s354 = smul.addr %s353, 8
        %s355 = scalar_lea.vmem %s3, %s354
        // Predicated region
        $region37: #{_forward_impl.2} parent=31 // pred_check
          %p356 = pneg %p103
        $region38: #{_forward_impl.2} parent=31 // pred_check_branch
          %358 = sbr.rel (%p356) target = $region40
        $region39: #{_forward_impl.2} parent=31 // pred_region
          %s359 = smul.u32 8, %s17
        $region40: #{_forward_impl.2} parent=31 // pred_fallthru
          _
      $region32: #{_forward_impl.2} parent=5 // pred_fallthru
        _
      %p360 = scmp.le.s32.totalorder 2, %s12
      // Predicated region
      $region41: #{_forward_impl.2} parent=5 // pred_check
        %p361 = pneg %p360
      $region42: #{_forward_impl.2} parent=5 // pred_check_branch
        %363 = sbr.rel (%p361) target = $region44
      $region43: #{_forward_impl.2} parent=5 // pred_region
        %s364 = ssub.s32 %s12, 2
        // Predicated region
        $region45: #{_forward_impl.2} parent=43 // pred_check
          %p365 = pneg %p109
        $region46: #{_forward_impl.2} parent=43 // pred_check_branch
          %367 = sbr.rel (%p365) target = $region48
        $region47: #{_forward_impl.2} parent=43 // pred_region
          %s368 = smul.u32 8, %s18
          %p369 = scmp.lt.s32.totalorder %s368, 63
          %s370 = scalar_select %p369, %s368, 63
          %s371 = smul.addr %s370, 8
          %s372 = scalar_lea.vmem %s3, %s371
        $region48: #{_forward_impl.2} parent=43 // pred_fallthru
          _
      $region44: #{_forward_impl.2} parent=5 // pred_fallthru
        _
    $region6: #{_forward_impl.2} parent=1 // loop_footer
      %s16 = sadd.s32 1, %s12
    $region7: #{_forward_impl.2} parent=1 // loop_footer_branch
      %11 = sbr.rel target = $region3
    $region8: #{_forward_impl.2} parent=1 // loop_exit
      _
    %373 = vsyncpa [#allocation3], 1
    %s374 = scalar_lea.sflag [#allocation3], 1
    %375 = vsyncpa %s374, 1

</llo_original>
